<compile_context>
chip_gen: v7x
topology: tpu7x:2x2x1
jax: 0.10.0
libtpu: 0.0.40
codegen_flags: <defaults>
</compile_context>

<pallas_src>
import functools

import jax
import jax.numpy as jnp
from jax.experimental import pallas as pl
from jax.experimental.pallas import tpu as pltpu

EPS = 1e-6
LANE = 128
SUBLANE = 8


def _round_up(x, m):
    return (x + m - 1) // m * m


def _vmem_budget_bytes():
    """Per-generation usable VMEM budget with headroom for Mosaic scratch."""
    try:
        cap = int(pltpu.get_tpu_info().vmem_capacity_bytes)
    except Exception:
        cap = 64 << 20  # safe lower bound (v7x per-core VMEM)
    return max(int(cap * 0.82), 32 << 20)


def _choose_tile_n(n, per_row_bytes, avail_bytes, max_tile_n):
    """Pick a row-tile size from the VMEM budget; prefer divisors of n and
    multiples of 256 (full MXU M-passes on v6e/v7x)."""
    n8 = _round_up(n, SUBLANE)
    t = int(avail_bytes // max(per_row_bytes, 1))
    t = max(SUBLANE, min(t, max_tile_n))
    if t >= n8:
        return n8
    step = 256 if t >= 256 else SUBLANE
    t = (t // step) * step
    # Prefer a tile that divides n exactly (avoids a padded copy of x), but do
    # not shrink below half the budgeted tile.
    for cand in range(t, max(step, t // 2) - 1, -step):
        if n % cand == 0:
            return cand
    return t


def _layer_norm(x, gamma, beta, *, inv_d, d_real, d_pad):
    """Two-pass LayerNorm over the last axis; padded lanes are masked so the
    centered variance stays exact with zero-padded features."""
    mean = jnp.sum(x, axis=-1, keepdims=True) * inv_d
    xc = x - mean
    if d_pad != d_real:
        mask = jax.lax.broadcasted_iota(jnp.int32, (1, d_pad), 1) < d_real
        xc = jnp.where(mask, xc, 0.0)
    var = jnp.sum(xc * xc, axis=-1, keepdims=True) * inv_d
    return xc * jax.lax.rsqrt(var + EPS) * gamma + beta


def ffn_kernel_resident(x_ref, gamma_ref, beta_ref, w1_ref, b1_ref, w2_ref,
                        b2_ref, o_ref, *, inv_d, d_real, d_pad):
    """Both weight matrices fully VMEM-resident; one row-tile per grid step."""
    x = x_ref[...].astype(jnp.float32)
    xn = _layer_norm(x, gamma_ref[...], beta_ref[...],
                     inv_d=inv_d, d_real=d_real, d_pad=d_pad)

    # linear1 + ReLU (dropout = identity in eval); bf16 MXU inputs, f32 accum.
    h = jnp.dot(xn.astype(jnp.bfloat16), w1_ref[...],
                preferred_element_type=jnp.float32) + b1_ref[...]
    h = jnp.maximum(h, 0.0)

    # linear2 (dropout = identity in eval).
    y = jnp.dot(h.astype(jnp.bfloat16), w2_ref[...],
                preferred_element_type=jnp.float32) + b2_ref[...]
    o_ref[...] = y.astype(o_ref.dtype)


def ffn_kernel_ftiled(x_ref, gamma_ref, beta_ref, w1_ref, b1_ref, w2_ref,
                      b2_ref, o_ref, xn_ref, acc_ref, *, inv_d, d_real, d_pad):
    """Hidden dimension tiled over grid axis 1: stream w1 column-blocks and
    w2 row-blocks, accumulate (tile_n, D_pad) f32 output in scratch."""
    k = pl.program_id(1)

    @pl.when(k == 0)
    def _():
        x = x_ref[...].astype(jnp.float32)
        xn = _layer_norm(x, gamma_ref[...], beta_ref[...],
                         inv_d=inv_d, d_real=d_real, d_pad=d_pad)
        xn_ref[...] = xn.astype(jnp.bfloat16)
        acc_ref[...] = jnp.zeros_like(acc_ref)

    h = jnp.dot(xn_ref[...], w1_ref[...],
                preferred_element_type=jnp.float32) + b1_ref[...]
    h = jnp.maximum(h, 0.0)
    acc_ref[...] += jnp.dot(h.astype(jnp.bfloat16), w2_ref[...],
                            preferred_element_type=jnp.float32)

    @pl.when(k == pl.num_programs(1) - 1)
    def _():
        o_ref[...] = (acc_ref[...] + b2_ref[...]).astype(o_ref.dtype)


def ffn_forward(x, gamma, beta, w1, b1, w2, b2, *,
                max_tile_n=1024, max_tile_f=2048, out_dtype=None,
                force_f_tiling=False):
    """x: (B, S, D). Weights in 'math' layout: w1 (D, F), w2 (F, D)."""
    B, S, D = x.shape
    F = w1.shape[1]
    N = B * S
    out_dtype = x.dtype if out_dtype is None else jnp.dtype(out_dtype)

    budget = _vmem_budget_bytes()

    D_pad = _round_up(D, LANE)
    F_pad = _round_up(F, LANE)

    # Resident bf16 weight footprint (single-buffered): w1 + w2.
    resident_w = 2 * D_pad * F_pad * 2
    use_f_tiling = force_f_tiling or (resident_w > budget // 3)

    if use_f_tiling:
        tile_f = min(F_pad, _round_up(max_tile_f, LANE))
        F_pad = _round_up(F, tile_f)
    else:
        tile_f = F_pad

    x_item = jnp.dtype(x.dtype).itemsize
    o_item = jnp.dtype(out_dtype).itemsize

    if use_f_tiling:
        # double-buffered x/out tiles + bf16 xn + f32 acc scratch + (tile_n, tile_f) h.
        per_row = 2 * D_pad * x_item + 2 * D_pad * o_item + D_pad * (2 + 4) + tile_f * 4
        resident = 2 * (2 * D_pad * tile_f) * 2 + 2 * tile_f * 4 + 3 * D_pad * 4
    else:
        per_row = 2 * D_pad * x_item + 2 * D_pad * o_item + F_pad * 4 + 2 * D_pad * 4
        resident = resident_w + (3 * D_pad + F_pad) * 4

    tile_n = _choose_tile_n(N, per_row, budget - resident, max_tile_n)
    N_pad = _round_up(N, tile_n)

    # Lane-dense / row-aligned operands; skip the pad copy when already aligned.
    x2d = x.reshape(N, D)
    if N_pad != N or D_pad != D:
        x2d = jnp.pad(x2d, ((0, N_pad - N), (0, D_pad - D)))

    def _pad_vec(v, target):
        v = v.astype(jnp.float32)
        if v.shape[0] != target:
            v = jnp.pad(v, (0, target - v.shape[0]))
        return v.reshape(1, target)

    def _pad_mat(w, rows, cols):
        if w.shape != (rows, cols):
            w = jnp.pad(w, ((0, rows - w.shape[0]), (0, cols - w.shape[1])))
        return w.astype(jnp.bfloat16)

    gamma_p = _pad_vec(gamma, D_pad)
    beta_p = _pad_vec(beta, D_pad)
    b1_p = _pad_vec(b1, F_pad)
    b2_p = _pad_vec(b2, D_pad)
    w1_p = _pad_mat(w1, D_pad, F_pad)
    w2_p = _pad_mat(w2, F_pad, D_pad)

    args = (x2d, gamma_p, beta_p, w1_p, b1_p, w2_p, b2_p)

    def _call(single_buffer):
        def const_spec(shape, index_map):
            # Constant-index operands never change blocks -> single VMEM buffer.
            if single_buffer:
                return pl.BlockSpec(shape, index_map,
                                    pipeline_mode=pl.Buffered(1))
            return pl.BlockSpec(shape, index_map)

        if not use_f_tiling:
            grid = (N_pad // tile_n,)
            kern = functools.partial(ffn_kernel_resident,
                                     inv_d=1.0 / float(D), d_real=D, d_pad=D_pad)
            in_specs = [
                pl.BlockSpec((tile_n, D_pad), lambda i: (i, 0)),      # x (streamed)
                const_spec((1, D_pad), lambda i: (0, 0)),             # gamma
                const_spec((1, D_pad), lambda i: (0, 0)),             # beta
                const_spec((D_pad, F_pad), lambda i: (0, 0)),         # w1
                const_spec((1, F_pad), lambda i: (0, 0)),             # b1
                const_spec((F_pad, D_pad), lambda i: (0, 0)),         # w2
                const_spec((1, D_pad), lambda i: (0, 0)),             # b2
            ]
            out_specs = pl.BlockSpec((tile_n, D_pad), lambda i: (i, 0))
            scratch = []
            dims = ("parallel",)
        else:
            grid = (N_pad // tile_n, F_pad // tile_f)
            kern = functools.partial(ffn_kernel_ftiled,
                                     inv_d=1.0 / float(D), d_real=D, d_pad=D_pad)
            in_specs = [
                pl.BlockSpec((tile_n, D_pad), lambda i, k: (i, 0)),   # x (const over k)
                const_spec((1, D_pad), lambda i, k: (0, 0)),          # gamma
                const_spec((1, D_pad), lambda i, k: (0, 0)),          # beta
                pl.BlockSpec((D_pad, tile_f), lambda i, k: (0, k)),   # w1 col-block
                pl.BlockSpec((1, tile_f), lambda i, k: (0, k)),       # b1 block
                pl.BlockSpec((tile_f, D_pad), lambda i, k: (k, 0)),   # w2 row-block
                const_spec((1, D_pad), lambda i, k: (0, 0)),          # b2
            ]
            out_specs = pl.BlockSpec((tile_n, D_pad), lambda i, k: (i, 0))
            scratch = [pltpu.VMEM((tile_n, D_pad), jnp.bfloat16),     # normalized x
                       pltpu.VMEM((tile_n, D_pad), jnp.float32)]      # f32 accumulator
            dims = ("parallel", "arbitrary")

        return pl.pallas_call(
            kern,
            out_shape=jax.ShapeDtypeStruct((N_pad, D_pad), out_dtype),
            grid_spec=pltpu.PrefetchScalarGridSpec(
                num_scalar_prefetch=0,
                grid=grid,
                in_specs=in_specs,
                out_specs=out_specs,
                scratch_shapes=scratch,
            ),
            compiler_params=pltpu.CompilerParams(
                dimension_semantics=dims,
                vmem_limit_bytes=int(budget),
            ),
        )(*args)

    try:
        out = _call(True)          # single-buffered constant operands
    except Exception:
        out = _call(False)         # fallback: default double-buffering

    if N_pad != N or D_pad != D:
        out = out[:N, :D]
    return out.reshape(B, S, D)


def reference_ffn(x, gamma, beta, w1, b1, w2, b2):
    xf = x.astype(jnp.float32)
    mean = jnp.mean(xf, axis=-1, keepdims=True)
    var = jnp.mean((xf - mean) ** 2, axis=-1, keepdims=True)
    xn = (xf - mean) / jnp.sqrt(var + EPS) * gamma + beta
    h = jnp.maximum(xn @ w1 + b1, 0.0)
    return (h @ w2 + b2).astype(x.dtype)


if __name__ == "__main__":
    key = jax.random.PRNGKey(0)
    kx, kw1, kb1, kw2, kb2 = jax.random.split(key, 5)

    # --- Case 1: resident-weight path (small dims). ---
    B, S, D_MODEL, D_FFN = 2, 8, 32, 64
    x = jax.random.normal(kx, (B, S, D_MODEL), dtype=jnp.float32)

    lim1 = 1.0 / (D_MODEL ** 0.5)
    lim2 = 1.0 / (D_FFN ** 0.5)
    w1 = jax.random.uniform(kw1, (D_MODEL, D_FFN), jnp.float32, -lim1, lim1)
    b1 = jax.random.uniform(kb1, (D_FFN,), jnp.float32, -lim1, lim1)
    w2 = jax.random.uniform(kw2, (D_FFN, D_MODEL), jnp.float32, -lim2, lim2)
    b2 = jax.random.uniform(kb2, (D_MODEL,), jnp.float32, -lim2, lim2)
    gamma = jnp.ones((D_MODEL,), jnp.float32)
    beta = jnp.zeros((D_MODEL,), jnp.float32)

    out = jax.block_until_ready(ffn_forward(x, gamma, beta, w1, b1, w2, b2))
    ref = reference_ffn(x, gamma, beta, w1, b1, w2, b2)
    assert out.shape == (B, S, D_MODEL)
    # bf16 MXU inputs with f32 accumulation -> compare at bf16-level tolerance.
    assert jnp.allclose(out, ref, atol=5e-2, rtol=5e-2)

    # --- Case 2: exercise the F-tiled (streamed-weight) fallback path. ---
    F_BIG = 256
    w1b = jax.random.uniform(kw1, (D_MODEL, F_BIG), jnp.float32, -lim1, lim1)
    b1b = jax.random.uniform(kb1, (F_BIG,), jnp.float32, -lim1, lim1)
    w2b = jax.random.uniform(kw2, (F_BIG, D_MODEL), jnp.float32, -lim2, lim2)
    b2b = jax.random.uniform(kb2, (D_MODEL,), jnp.float32, -lim2, lim2)

    out2 = jax.block_until_ready(
        ffn_forward(x, gamma, beta, w1b, b1b, w2b, b2b,
                    force_f_tiling=True, max_tile_f=128))
    ref2 = reference_ffn(x, gamma, beta, w1b, b1b, w2b, b2b)
    assert out2.shape == (B, S, D_MODEL)
    assert jnp.allclose(out2, ref2, atol=5e-2, rtol=5e-2)

    print("KERNEL_OK")
</pallas_src>

<mosaic_0001>
module attributes {stable_mosaic.version = 11 : i64} {
  func.func @ffn_kernel_resident(%arg0: i32, %arg1: memref<16x128xf32, #tpu.memory_space<vmem>>, %arg2: memref<1x128xf32, #tpu.memory_space<vmem>>, %arg3: memref<1x128xf32, #tpu.memory_space<vmem>>, %arg4: memref<128x128xbf16, #tpu.memory_space<vmem>>, %arg5: memref<1x128xf32, #tpu.memory_space<vmem>>, %arg6: memref<128x128xbf16, #tpu.memory_space<vmem>>, %arg7: memref<1x128xf32, #tpu.memory_space<vmem>>, %arg8: memref<16x128xf32, #tpu.memory_space<vmem>>) attributes {dimension_semantics = [#tpu.dimension_semantics<parallel>], iteration_bounds = array<i64: 1>, scalar_prefetch = 0 : i64, scratch_operands = 0 : i64, tpu.core_type = #tpu.core_type<tc>, window_params = [{transform_indices = @transform_0, window_bounds = array<i64: 16, 128>}, {pipeline_mode = #tpu.pipeline_mode<synchronous>, transform_indices = @transform_1, window_bounds = array<i64: 1, 128>}, {pipeline_mode = #tpu.pipeline_mode<synchronous>, transform_indices = @transform_2, window_bounds = array<i64: 1, 128>}, {pipeline_mode = #tpu.pipeline_mode<synchronous>, transform_indices = @transform_3, window_bounds = array<i64: 128, 128>}, {pipeline_mode = #tpu.pipeline_mode<synchronous>, transform_indices = @transform_4, window_bounds = array<i64: 1, 128>}, {pipeline_mode = #tpu.pipeline_mode<synchronous>, transform_indices = @transform_5, window_bounds = array<i64: 128, 128>}, {pipeline_mode = #tpu.pipeline_mode<synchronous>, transform_indices = @transform_6, window_bounds = array<i64: 1, 128>}, {transform_indices = @transform_7, window_bounds = array<i64: 16, 128>}]} {
    %c0 = arith.constant 0 : index
    %c0_0 = arith.constant 0 : index
    %0 = vector.load %arg1[%c0, %c0_0] : memref<16x128xf32, #tpu.memory_space<vmem>>, vector<16x128xf32>
    %c0_1 = arith.constant 0 : index
    %c0_2 = arith.constant 0 : index
    %1 = vector.load %arg2[%c0_1, %c0_2] : memref<1x128xf32, #tpu.memory_space<vmem>>, vector<1x128xf32>
    %c0_3 = arith.constant 0 : index
    %c0_4 = arith.constant 0 : index
    %2 = vector.load %arg3[%c0_3, %c0_4] : memref<1x128xf32, #tpu.memory_space<vmem>>, vector<1x128xf32>
    %cst = arith.constant dense<0.000000e+00> : vector<16xf32>
    %3 = vector.multi_reduction <add>, %0, %cst [1] : vector<16x128xf32> to vector<16xf32>
    %4 = vector.shape_cast %3 : vector<16xf32> to vector<16x1xf32>
    %cst_5 = arith.constant 3.125000e-02 : f32
    %5 = vector.broadcast %cst_5 : f32 to vector<16x1xf32>
    %6 = arith.mulf %4, %5 : vector<16x1xf32>
    %7 = vector.broadcast %6 : vector<16x1xf32> to vector<16x128xf32>
    %8 = arith.subf %0, %7 : vector<16x128xf32>
    %9 = tpu.iota {dimensions = array<i32: 1>} : vector<1x128xi32>
    %c32_i32 = arith.constant 32 : i32
    %10 = vector.broadcast %c32_i32 : i32 to vector<1x128xi32>
    %11 = arith.cmpi slt, %9, %10 : vector<1x128xi32>
    %cst_6 = arith.constant 0.000000e+00 : f32
    %12 = vector.shape_cast %11 : vector<1x128xi1> to vector<1x128xi1>
    %13 = vector.broadcast %12 : vector<1x128xi1> to vector<16x128xi1>
    %14 = vector.broadcast %cst_6 : f32 to vector<16x128xf32>
    %15 = arith.select %13, %8, %14 : vector<16x128xi1>, vector<16x128xf32>
    %16 = arith.mulf %15, %15 : vector<16x128xf32>
    %cst_7 = arith.constant dense<0.000000e+00> : vector<16xf32>
    %17 = vector.multi_reduction <add>, %16, %cst_7 [1] : vector<16x128xf32> to vector<16xf32>
    %18 = vector.shape_cast %17 : vector<16xf32> to vector<16x1xf32>
    %cst_8 = arith.constant 3.125000e-02 : f32
    %19 = vector.broadcast %cst_8 : f32 to vector<16x1xf32>
    %20 = arith.mulf %18, %19 : vector<16x1xf32>
    %cst_9 = arith.constant 9.99999997E-7 : f32
    %21 = vector.broadcast %cst_9 : f32 to vector<16x1xf32>
    %22 = arith.addf %20, %21 : vector<16x1xf32>
    %23 = math.rsqrt %22 : vector<16x1xf32>
    %24 = vector.broadcast %23 : vector<16x1xf32> to vector<16x128xf32>
    %25 = arith.mulf %15, %24 : vector<16x128xf32>
    %26 = vector.broadcast %1 : vector<1x128xf32> to vector<16x128xf32>
    %27 = arith.mulf %25, %26 : vector<16x128xf32>
    %28 = vector.broadcast %2 : vector<1x128xf32> to vector<16x128xf32>
    %29 = arith.addf %27, %28 : vector<16x128xf32>
    %30 = arith.truncf %29 : vector<16x128xf32> to vector<16x128xbf16>
    %c0_10 = arith.constant 0 : index
    %c0_11 = arith.constant 0 : index
    %31 = vector.load %arg4[%c0_10, %c0_11] : memref<128x128xbf16, #tpu.memory_space<vmem>>, vector<128x128xbf16>
    %cst_12 = arith.constant dense<0.000000e+00> : vector<16x128xf32>
    %32 = tpu.matmul %30, %31, %cst_12 {dimension_numbers = #tpu.dot_dimension_numbers<[1], [0], [0], [1], [0, 0, 1, 1], [], []>} : vector<16x128xbf16>, vector<128x128xbf16>, vector<16x128xf32> -> vector<16x128xf32>
    %c0_13 = arith.constant 0 : index
    %c0_14 = arith.constant 0 : index
    %33 = vector.load %arg5[%c0_13, %c0_14] : memref<1x128xf32, #tpu.memory_space<vmem>>, vector<1x128xf32>
    %34 = vector.broadcast %33 : vector<1x128xf32> to vector<16x128xf32>
    %35 = arith.addf %32, %34 : vector<16x128xf32>
    %cst_15 = arith.constant 0.000000e+00 : f32
    %36 = vector.broadcast %cst_15 : f32 to vector<16x128xf32>
    %37 = arith.maximumf %35, %36 : vector<16x128xf32>
    %38 = arith.truncf %37 : vector<16x128xf32> to vector<16x128xbf16>
    %c0_16 = arith.constant 0 : index
    %c0_17 = arith.constant 0 : index
    %39 = vector.load %arg6[%c0_16, %c0_17] : memref<128x128xbf16, #tpu.memory_space<vmem>>, vector<128x128xbf16>
    %cst_18 = arith.constant dense<0.000000e+00> : vector<16x128xf32>
    %40 = tpu.matmul %38, %39, %cst_18 {dimension_numbers = #tpu.dot_dimension_numbers<[1], [0], [0], [1], [0, 0, 1, 1], [], []>} : vector<16x128xbf16>, vector<128x128xbf16>, vector<16x128xf32> -> vector<16x128xf32>
    %c0_19 = arith.constant 0 : index
    %c0_20 = arith.constant 0 : index
    %41 = vector.load %arg7[%c0_19, %c0_20] : memref<1x128xf32, #tpu.memory_space<vmem>>, vector<1x128xf32>
    %42 = vector.broadcast %41 : vector<1x128xf32> to vector<16x128xf32>
    %43 = arith.addf %40, %42 : vector<16x128xf32>
    %c0_21 = arith.constant 0 : index
    %c0_22 = arith.constant 0 : index
    %44 = vector.load %arg8[%c0_21, %c0_22] : memref<16x128xf32, #tpu.memory_space<vmem>>, vector<16x128xf32>
    tpu.vector_store %arg8[%c0_21, %c0_22], %43 {strides = array<i32>} : memref<16x128xf32, #tpu.memory_space<vmem>>, vector<16x128xf32>,
    return
  }
  func.func @transform_0(%arg0: i32) -> (i32, i32) {
    %c0_i32 = arith.constant 0 : i32
    %c0_i32_0 = arith.constant 0 : i32
    return %arg0, %c0_i32 : i32, i32
  }
  func.func @transform_1(%arg0: i32) -> (i32, i32) {
    %c0_i32 = arith.constant 0 : i32
    %c0_i32_0 = arith.constant 0 : i32
    %c0_i32_1 = arith.constant 0 : i32
    return %c0_i32, %c0_i32_0 : i32, i32
  }
  func.func @transform_2(%arg0: i32) -> (i32, i32) {
    %c0_i32 = arith.constant 0 : i32
    %c0_i32_0 = arith.constant 0 : i32
    %c0_i32_1 = arith.constant 0 : i32
    return %c0_i32, %c0_i32_0 : i32, i32
  }
  func.func @transform_3(%arg0: i32) -> (i32, i32) {
    %c0_i32 = arith.constant 0 : i32
    %c0_i32_0 = arith.constant 0 : i32
    %c0_i32_1 = arith.constant 0 : i32
    return %c0_i32, %c0_i32_0 : i32, i32
  }
  func.func @transform_4(%arg0: i32) -> (i32, i32) {
    %c0_i32 = arith.constant 0 : i32
    %c0_i32_0 = arith.constant 0 : i32
    %c0_i32_1 = arith.constant 0 : i32
    return %c0_i32, %c0_i32_0 : i32, i32
  }
  func.func @transform_5(%arg0: i32) -> (i32, i32) {
    %c0_i32 = arith.constant 0 : i32
    %c0_i32_0 = arith.constant 0 : i32
    %c0_i32_1 = arith.constant 0 : i32
    return %c0_i32, %c0_i32_0 : i32, i32
  }
  func.func @transform_6(%arg0: i32) -> (i32, i32) {
    %c0_i32 = arith.constant 0 : i32
    %c0_i32_0 = arith.constant 0 : i32
    %c0_i32_1 = arith.constant 0 : i32
    return %c0_i32, %c0_i32_0 : i32, i32
  }
  func.func @transform_7(%arg0: i32) -> (i32, i32) {
    %c0_i32 = arith.constant 0 : i32
    %c0_i32_0 = arith.constant 0 : i32
    return %arg0, %c0_i32 : i32, i32
  }
}

module attributes {stable_mosaic.version = 11 : i64} {
  func.func @ffn_kernel_resident(%arg0: i32, %arg1: memref<16x128xf32, #tpu.memory_space<vmem>>, %arg2: memref<1x128xf32, #tpu.memory_space<vmem>>, %arg3: memref<1x128xf32, #tpu.memory_space<vmem>>, %arg4: memref<128x128xbf16, #tpu.memory_space<vmem>>, %arg5: memref<1x128xf32, #tpu.memory_space<vmem>>, %arg6: memref<128x128xbf16, #tpu.memory_space<vmem>>, %arg7: memref<1x128xf32, #tpu.memory_space<vmem>>, %arg8: memref<16x128xf32, #tpu.memory_space<vmem>>) attributes {dimension_semantics = [#tpu.dimension_semantics<parallel>], iteration_bounds = array<i64: 1>, scalar_prefetch = 0 : i64, scratch_operands = 0 : i64, tpu.core_type = #tpu.core_type<tc>, window_params = [{transform_indices = @transform_0, window_bounds = array<i64: 16, 128>}, {pipeline_mode = #tpu.pipeline_mode<synchronous>, transform_indices = @transform_1, window_bounds = array<i64: 1, 128>}, {pipeline_mode = #tpu.pipeline_mode<synchronous>, transform_indices = @transform_2, window_bounds = array<i64: 1, 128>}, {pipeline_mode = #tpu.pipeline_mode<synchronous>, transform_indices = @transform_3, window_bounds = array<i64: 128, 128>}, {pipeline_mode = #tpu.pipeline_mode<synchronous>, transform_indices = @transform_4, window_bounds = array<i64: 1, 128>}, {pipeline_mode = #tpu.pipeline_mode<synchronous>, transform_indices = @transform_5, window_bounds = array<i64: 128, 128>}, {pipeline_mode = #tpu.pipeline_mode<synchronous>, transform_indices = @transform_6, window_bounds = array<i64: 1, 128>}, {transform_indices = @transform_7, window_bounds = array<i64: 16, 128>}]} {
    %c0 = arith.constant 0 : index
    %c0_0 = arith.constant 0 : index
    %0 = vector.load %arg1[%c0, %c0_0] : memref<16x128xf32, #tpu.memory_space<vmem>>, vector<16x128xf32>
    %c0_1 = arith.constant 0 : index
    %c0_2 = arith.constant 0 : index
    %1 = vector.load %arg2[%c0_1, %c0_2] : memref<1x128xf32, #tpu.memory_space<vmem>>, vector<1x128xf32>
    %c0_3 = arith.constant 0 : index
    %c0_4 = arith.constant 0 : index
    %2 = vector.load %arg3[%c0_3, %c0_4] : memref<1x128xf32, #tpu.memory_space<vmem>>, vector<1x128xf32>
    %cst = arith.constant dense<0.000000e+00> : vector<16xf32>
    %3 = vector.multi_reduction <add>, %0, %cst [1] : vector<16x128xf32> to vector<16xf32>
    %4 = vector.shape_cast %3 : vector<16xf32> to vector<16x1xf32>
    %cst_5 = arith.constant 3.125000e-02 : f32
    %5 = vector.broadcast %cst_5 : f32 to vector<16x1xf32>
    %6 = arith.mulf %4, %5 : vector<16x1xf32>
    %7 = vector.broadcast %6 : vector<16x1xf32> to vector<16x128xf32>
    %8 = arith.subf %0, %7 : vector<16x128xf32>
    %9 = tpu.iota {dimensions = array<i32: 1>} : vector<1x128xi32>
    %c32_i32 = arith.constant 32 : i32
    %10 = vector.broadcast %c32_i32 : i32 to vector<1x128xi32>
    %11 = arith.cmpi slt, %9, %10 : vector<1x128xi32>
    %cst_6 = arith.constant 0.000000e+00 : f32
    %12 = vector.shape_cast %11 : vector<1x128xi1> to vector<1x128xi1>
    %13 = vector.broadcast %12 : vector<1x128xi1> to vector<16x128xi1>
    %14 = vector.broadcast %cst_6 : f32 to vector<16x128xf32>
    %15 = arith.select %13, %8, %14 : vector<16x128xi1>, vector<16x128xf32>
    %16 = arith.mulf %15, %15 : vector<16x128xf32>
    %cst_7 = arith.constant dense<0.000000e+00> : vector<16xf32>
    %17 = vector.multi_reduction <add>, %16, %cst_7 [1] : vector<16x128xf32> to vector<16xf32>
    %18 = vector.shape_cast %17 : vector<16xf32> to vector<16x1xf32>
    %cst_8 = arith.constant 3.125000e-02 : f32
    %19 = vector.broadcast %cst_8 : f32 to vector<16x1xf32>
    %20 = arith.mulf %18, %19 : vector<16x1xf32>
    %cst_9 = arith.constant 9.99999997E-7 : f32
    %21 = vector.broadcast %cst_9 : f32 to vector<16x1xf32>
    %22 = arith.addf %20, %21 : vector<16x1xf32>
    %23 = math.rsqrt %22 : vector<16x1xf32>
    %24 = vector.broadcast %23 : vector<16x1xf32> to vector<16x128xf32>
    %25 = arith.mulf %15, %24 : vector<16x128xf32>
    %26 = vector.broadcast %1 : vector<1x128xf32> to vector<16x128xf32>
    %27 = arith.mulf %25, %26 : vector<16x128xf32>
    %28 = vector.broadcast %2 : vector<1x128xf32> to vector<16x128xf32>
    %29 = arith.addf %27, %28 : vector<16x128xf32>
    %30 = arith.truncf %29 : vector<16x128xf32> to vector<16x128xbf16>
    %c0_10 = arith.constant 0 : index
    %c0_11 = arith.constant 0 : index
    %31 = vector.load %arg4[%c0_10, %c0_11] : memref<128x128xbf16, #tpu.memory_space<vmem>>, vector<128x128xbf16>
    %cst_12 = arith.constant dense<0.000000e+00> : vector<16x128xf32>
    %32 = tpu.matmul %30, %31, %cst_12 {dimension_numbers = #tpu.dot_dimension_numbers<[1], [0], [0], [1], [0, 0, 1, 1], [], []>} : vector<16x128xbf16>, vector<128x128xbf16>, vector<16x128xf32> -> vector<16x128xf32>
    %c0_13 = arith.constant 0 : index
    %c0_14 = arith.constant 0 : index
    %33 = vector.load %arg5[%c0_13, %c0_14] : memref<1x128xf32, #tpu.memory_space<vmem>>, vector<1x128xf32>
    %34 = vector.broadcast %33 : vector<1x128xf32> to vector<16x128xf32>
    %35 = arith.addf %32, %34 : vector<16x128xf32>
    %cst_15 = arith.constant 0.000000e+00 : f32
    %36 = vector.broadcast %cst_15 : f32 to vector<16x128xf32>
    %37 = arith.maximumf %35, %36 : vector<16x128xf32>
    %38 = arith.truncf %37 : vector<16x128xf32> to vector<16x128xbf16>
    %c0_16 = arith.constant 0 : index
    %c0_17 = arith.constant 0 : index
    %39 = vector.load %arg6[%c0_16, %c0_17] : memref<128x128xbf16, #tpu.memory_space<vmem>>, vector<128x128xbf16>
    %cst_18 = arith.constant dense<0.000000e+00> : vector<16x128xf32>
    %40 = tpu.matmul %38, %39, %cst_18 {dimension_numbers = #tpu.dot_dimension_numbers<[1], [0], [0], [1], [0, 0, 1, 1], [], []>} : vector<16x128xbf16>, vector<128x128xbf16>, vector<16x128xf32> -> vector<16x128xf32>
    %c0_19 = arith.constant 0 : index
    %c0_20 = arith.constant 0 : index
    %41 = vector.load %arg7[%c0_19, %c0_20] : memref<1x128xf32, #tpu.memory_space<vmem>>, vector<1x128xf32>
    %42 = vector.broadcast %41 : vector<1x128xf32> to vector<16x128xf32>
    %43 = arith.addf %40, %42 : vector<16x128xf32>
    %c0_21 = arith.constant 0 : index
    %c0_22 = arith.constant 0 : index
    %44 = vector.load %arg8[%c0_21, %c0_22] : memref<16x128xf32, #tpu.memory_space<vmem>>, vector<16x128xf32>
    tpu.vector_store %arg8[%c0_21, %c0_22], %43 {strides = array<i32>} : memref<16x128xf32, #tpu.memory_space<vmem>>, vector<16x128xf32>,
    return
  }
  func.func @transform_0(%arg0: i32) -> (i32, i32) {
    %c0_i32 = arith.constant 0 : i32
    %c0_i32_0 = arith.constant 0 : i32
    return %arg0, %c0_i32 : i32, i32
  }
  func.func @transform_1(%arg0: i32) -> (i32, i32) {
    %c0_i32 = arith.constant 0 : i32
    %c0_i32_0 = arith.constant 0 : i32
    %c0_i32_1 = arith.constant 0 : i32
    return %c0_i32, %c0_i32_0 : i32, i32
  }
  func.func @transform_2(%arg0: i32) -> (i32, i32) {
    %c0_i32 = arith.constant 0 : i32
    %c0_i32_0 = arith.constant 0 : i32
    %c0_i32_1 = arith.constant 0 : i32
    return %c0_i32, %c0_i32_0 : i32, i32
  }
  func.func @transform_3(%arg0: i32) -> (i32, i32) {
    %c0_i32 = arith.constant 0 : i32
    %c0_i32_0 = arith.constant 0 : i32
    %c0_i32_1 = arith.constant 0 : i32
    return %c0_i32, %c0_i32_0 : i32, i32
  }
  func.func @transform_4(%arg0: i32) -> (i32, i32) {
    %c0_i32 = arith.constant 0 : i32
    %c0_i32_0 = arith.constant 0 : i32
    %c0_i32_1 = arith.constant 0 : i32
    return %c0_i32, %c0_i32_0 : i32, i32
  }
  func.func @transform_5(%arg0: i32) -> (i32, i32) {
    %c0_i32 = arith.constant 0 : i32
    %c0_i32_0 = arith.constant 0 : i32
    %c0_i32_1 = arith.constant 0 : i32
    return %c0_i32, %c0_i32_0 : i32, i32
  }
  func.func @transform_6(%arg0: i32) -> (i32, i32) {
    %c0_i32 = arith.constant 0 : i32
    %c0_i32_0 = arith.constant 0 : i32
    %c0_i32_1 = arith.constant 0 : i32
    return %c0_i32, %c0_i32_0 : i32, i32
  }
  func.func @transform_7(%arg0: i32) -> (i32, i32) {
    %c0_i32 = arith.constant 0 : i32
    %c0_i32_0 = arith.constant 0 : i32
    return %arg0, %c0_i32 : i32, i32
  }
}

</mosaic_0001>

<llo_original>
// kernel: tpu_custom_call.1
$region0: #{tpu_custom_call.1}
  #allocation0 [shape = 'u32[]', space=smem, size = 0x4, offset = 0x4, fixed_abs, tag = 'smem constant byte address 0x4 - core index']
  #allocation1 [shape = 'u32[144,128]{1,0:T(1,128)}', space=vmem, size = 0x12000, scoped, tag = 'internal scratch']
  %s0 = inlined_call_operand.hbm [shape: f32[16,128], index: 0, kind: input, shape index: {}]
  %s1 = inlined_call_operand.vmem [shape: f32[1,128], index: 1, kind: input, shape index: {}]
  %s2 = inlined_call_operand.vmem [shape: f32[1,128], index: 2, kind: input, shape index: {}]
  %s3 = inlined_call_operand.hbm [shape: bf16[128,128], index: 3, kind: input, shape index: {}]
  %s4 = inlined_call_operand.vmem [shape: f32[1,128], index: 4, kind: input, shape index: {}]
  %s5 = inlined_call_operand.hbm [shape: bf16[128,128], index: 5, kind: input, shape index: {}]
  %s6 = inlined_call_operand.vmem [shape: f32[1,128], index: 6, kind: input, shape index: {}]
  %s7 = inlined_call_operand.hbm [shape: f32[16,128], index: 7, kind: output, shape index: {}]
  %s8 = sld [smem:[#allocation0]]
  $region50: #{tpu_custom_call.1} parent=0
    _
  %s10 = ssub.s32 1, %s8
  %s11 = scalar_select 0, %s10, %s8
  $region1: #{tpu_custom_call.1} parent=0
    #allocation2 [shape = 'u8[8192]{0}', space=vmem, size = 0x2000, scoped, tag = 'input window, operand 0, single buffered']
    #allocation3 [shape = 's32[1]{0}', space=sflag, size = 0x4, scoped, tag = 'scoped memory for tpu_custom_call.1']
    #allocation4 [shape = 's32[1]{0}', space=sflag, size = 0x4, scoped, tag = 'scoped memory for tpu_custom_call.1']
    #allocation5 [shape = 'u8[32768]{0}', space=vmem, size = 0x8000, scoped, tag = 'input window, operand 3, single buffered']
    #allocation6 [shape = 's32[1]{0}', space=sflag, size = 0x4, scoped, tag = 'scoped memory for tpu_custom_call.1']
    #allocation7 [shape = 'u8[32768]{0}', space=vmem, size = 0x8000, scoped, tag = 'input window, operand 5, single buffered']
    #allocation8 [shape = 'u8[8192]{0}', space=vmem, size = 0x2000, scoped, tag = 'output window, operand 0, single buffered']
    %12 = vsyncpa [#allocation3], 0
    %13 = vsyncpa [#allocation6], 0
    %14 = vsyncpa [#allocation4], 0
    // Predicated region
    $region2: #{tpu_custom_call.1} parent=1 // pred_check
      _
    $region3: #{tpu_custom_call.1} parent=1 // pred_check_branch
      %16 = sbr.rel (0) target = $region5
    $region4: #{tpu_custom_call.1} parent=1 // pred_region
      %s18 = ssub.s32 256, 256
      %19 = vsyncadd [#allocation3], %s18
      %s20 = sshll.u32 [#allocation2], 4
      %s21 = int_to_ptr.vmem [resolvable:$true] %s20
      %26 = dma.hbm_to_vmem [thread:$0]  %s0, 256, %s21, [#allocation3], 128, 128, 8
    $region5: #{tpu_custom_call.1} parent=1 // pred_fallthru
      _
    // Predicated region
    $region6: #{tpu_custom_call.1} parent=1 // pred_check
      _
    $region7: #{tpu_custom_call.1} parent=1 // pred_check_branch
      %28 = sbr.rel (0) target = $region9
    $region8: #{tpu_custom_call.1} parent=1 // pred_region
      _
    $region9: #{tpu_custom_call.1} parent=1 // pred_fallthru
      _
    // Predicated region
    $region10: #{tpu_custom_call.1} parent=1 // pred_check
      _
    $region11: #{tpu_custom_call.1} parent=1 // pred_check_branch
      %30 = sbr.rel (0) target = $region13
    $region12: #{tpu_custom_call.1} parent=1 // pred_region
      _
    $region13: #{tpu_custom_call.1} parent=1 // pred_fallthru
      _
    // Predicated region
    $region14: #{tpu_custom_call.1} parent=1 // pred_check
      _
    $region15: #{tpu_custom_call.1} parent=1 // pred_check_branch
      %32 = sbr.rel (0) target = $region17
    $region16: #{tpu_custom_call.1} parent=1 // pred_region
      %s34 = ssub.s32 1024, 1024
      %35 = vsyncadd [#allocation6], %s34
      %s36 = sshll.u32 [#allocation5], 4
      %s37 = int_to_ptr.vmem [resolvable:$true] %s36
      %42 = dma.hbm_to_vmem [thread:$0]  %s3, 1024, %s37, [#allocation6], 64, 64, 4
    $region17: #{tpu_custom_call.1} parent=1 // pred_fallthru
      _
    // Predicated region
    $region18: #{tpu_custom_call.1} parent=1 // pred_check
      _
    $region19: #{tpu_custom_call.1} parent=1 // pred_check_branch
      %44 = sbr.rel (0) target = $region21
    $region20: #{tpu_custom_call.1} parent=1 // pred_region
      _
    $region21: #{tpu_custom_call.1} parent=1 // pred_fallthru
      _
    // Predicated region
    $region22: #{tpu_custom_call.1} parent=1 // pred_check
      _
    $region23: #{tpu_custom_call.1} parent=1 // pred_check_branch
      %46 = sbr.rel (0) target = $region25
    $region24: #{tpu_custom_call.1} parent=1 // pred_region
      %s48 = ssub.s32 1024, 1024
      %49 = vsyncadd [#allocation6], %s48
      %s50 = sshll.u32 [#allocation7], 4
      %s51 = int_to_ptr.vmem [resolvable:$true] %s50
      %56 = dma.hbm_to_vmem [thread:$0]  %s5, 1024, %s51, [#allocation6], 64, 64, 4
    $region25: #{tpu_custom_call.1} parent=1 // pred_fallthru
      _
    // Predicated region
    $region26: #{tpu_custom_call.1} parent=1 // pred_check
      _
    $region27: #{tpu_custom_call.1} parent=1 // pred_check_branch
      %58 = sbr.rel (0) target = $region29
    $region28: #{tpu_custom_call.1} parent=1 // pred_region
      _
    $region29: #{tpu_custom_call.1} parent=1 // pred_fallthru
      _
    // Predicated region
    $region30: #{tpu_custom_call.1} parent=1 // pred_check
      _
    $region31: #{tpu_custom_call.1} parent=1 // pred_check_branch
      %60 = sbr.rel (0) target = $region33
    $region32: #{tpu_custom_call.1} parent=1 // pred_region
      %61 = dma.done [#allocation3], 256
    $region33: #{tpu_custom_call.1} parent=1 // pred_fallthru
      _
    // Predicated region
    $region34: #{tpu_custom_call.1} parent=1 // pred_check
      _
    $region35: #{tpu_custom_call.1} parent=1 // pred_check_branch
      %63 = sbr.rel (0) target = $region37
    $region36: #{tpu_custom_call.1} parent=1 // pred_region
      %64 = dma.done [#allocation6], 1024
    $region37: #{tpu_custom_call.1} parent=1 // pred_fallthru
      _
    // Predicated region
    $region38: #{tpu_custom_call.1} parent=1 // pred_check
      _
    $region39: #{tpu_custom_call.1} parent=1 // pred_check_branch
      %66 = sbr.rel (0) target = $region41
    $region40: #{tpu_custom_call.1} parent=1 // pred_region
      %67 = dma.done [#allocation6], 1024
    $region41: #{tpu_custom_call.1} parent=1 // pred_fallthru
      _
    %v69 = vld [vmem:[#allocation2] sm:$0xff]
    %v70 = vld [vmem:[#allocation2 + $0x8] sm:$0xff]
    %v71 = vld [vmem:[%s1] sm:$0x1]
    %v72 = vld [vmem:[%s2] sm:$0x1]
    %73 = vadd.xlane.f32.xlu0 %v69
    %v74 = vpop.xlane.xlu0 %73
    %75 = vadd.xlane.f32.xlu0 %v70
    %v76 = vpop.xlane.xlu0 %75
    %v77 = vmul.f32 %v74, 0.03125
    %v78 = vmul.f32 %v76, 0.03125
    %v79 = vsub.f32 %v69, %v77
    %v80 = vsub.f32 %v70, %v78
    %v81 = vlaneseq
    %v82 = vand.u32 %v81, 127
    %vm83 = vcmp.lt.s32.totalorder %v82, 32
    %v84 = vsel %vm83, 1, 0
    %vm85 = vcmp.eq.s32.totalorder %v84, 1
    %v86 = vsel %vm85, %v79, 0.0
    %v87 = vsel %vm85, %v80, 0.0
    %v88 = vmul.f32 %v86, %v86
    %v89 = vmul.f32 %v87, %v87
    %90 = vadd.xlane.f32.xlu0 %v88
    %v91 = vpop.xlane.xlu0 %90
    %92 = vadd.xlane.f32.xlu0 %v89
    %v93 = vpop.xlane.xlu0 %92
    %v94 = vmul.f32 %v91, 0.03125
    %v95 = vmul.f32 %v93, 0.03125
    %v96 = vadd.f32 %v94, 1e-06
    %v97 = vadd.f32 %v95, 1e-06
    %v98 = vrsqrt.pop %v96
    %v99 = vrsqrt.pop %v97
    %v100 = vmul.f32 %v86, %v98
    %v101 = vmul.f32 %v87, %v99
    %v103 = vlaneseq
    %v104 = vshrl.u32 %v103, 7
    %v105 = vsub.s32 0, %v104
    %v106 = vrot.slane %v71, %v105
    %v108 = vmul.f32 %v100, %v106
    %v109 = vmul.f32 %v101, %v106
    %v111 = vlaneseq
    %v112 = vshrl.u32 %v111, 7
    %v113 = vsub.s32 0, %v112
    %v114 = vrot.slane %v72, %v113
    %v116 = vadd.f32 %v108, %v114
    %v117 = vadd.f32 %v109, %v114
    %v118 = vpack.c.bf16 %v117, %v116
    %v119 = vld [vmem:[#allocation5] sm:$0xf]
    %v120 = vld [vmem:[#allocation5 + $0x4] sm:$0xf]
    %v121 = vld [vmem:[#allocation5 + $0x8] sm:$0xf]
    %v122 = vld [vmem:[#allocation5 + $0xc] sm:$0xf]
    %v123 = vld [vmem:[#allocation5 + $0x10] sm:$0xf]
    %v124 = vld [vmem:[#allocation5 + $0x14] sm:$0xf]
    %v125 = vld [vmem:[#allocation5 + $0x18] sm:$0xf]
    %v126 = vld [vmem:[#allocation5 + $0x1c] sm:$0xf]
    %v127 = vld [vmem:[#allocation5 + $0x20] sm:$0xf]
    %v128 = vld [vmem:[#allocation5 + $0x24] sm:$0xf]
    %v129 = vld [vmem:[#allocation5 + $0x28] sm:$0xf]
    %v130 = vld [vmem:[#allocation5 + $0x2c] sm:$0xf]
    %v131 = vld [vmem:[#allocation5 + $0x30] sm:$0xf]
    %v132 = vld [vmem:[#allocation5 + $0x34] sm:$0xf]
    %v133 = vld [vmem:[#allocation5 + $0x38] sm:$0xf]
    %v134 = vld [vmem:[#allocation5 + $0x3c] sm:$0xf]
    %v135 = vld [vmem:[%s4] sm:$0x1]
    %v137 = vlaneseq
    %v138 = vshrl.u32 %v137, 7
    %v139 = vsub.s32 0, %v138
    %v140 = vrot.slane %v135, %v139
    %v158 = vunpack.c.l.b16 %v119
    %v159 = vunpack.c.l.b16 %v120
    %v160 = vunpack.c.l.b16 %v121
    %v161 = vunpack.c.l.b16 %v122
    %v162 = vunpack.c.l.b16 %v123
    %v163 = vunpack.c.l.b16 %v124
    %v164 = vunpack.c.l.b16 %v125
    %v165 = vunpack.c.l.b16 %v126
    %v166 = vunpack.c.l.b16 %v127
    %v167 = vunpack.c.l.b16 %v128
    %v168 = vunpack.c.l.b16 %v129
    %v169 = vunpack.c.l.b16 %v130
    %v170 = vunpack.c.l.b16 %v131
    %v171 = vunpack.c.l.b16 %v132
    %v172 = vunpack.c.l.b16 %v133
    %v173 = vunpack.c.l.b16 %v134
    %v174 = vpack.c.b16 %v159, %v158
    %v175 = vpack.c.b16 %v161, %v160
    %v176 = vpack.c.b16 %v163, %v162
    %v177 = vpack.c.b16 %v165, %v164
    %v178 = vpack.c.b16 %v167, %v166
    %v179 = vpack.c.b16 %v169, %v168
    %v180 = vpack.c.b16 %v171, %v170
    %v181 = vpack.c.b16 %v173, %v172
    %190 = vmatprep.subr.bf16.mxu0 0
    %191 = vmatpush1.bf16.msra.mxu0 %v174
    %192 = vmatprep.subr.bf16.mxu0 0
    %193 = vmatpush1.bf16.msra.mxu0 %v175
    %194 = vmatprep.subr.bf16.mxu0 0
    %195 = vmatpush1.bf16.msra.mxu0 %v176
    %196 = vmatprep.subr.bf16.mxu0 0
    %197 = vmatpush1.bf16.msra.mxu0 %v177
    %198 = vmatprep.subr.bf16.mxu0 0
    %199 = vmatpush1.bf16.msra.mxu0 %v178
    %200 = vmatprep.subr.bf16.mxu0 0
    %201 = vmatpush1.bf16.msra.mxu0 %v179
    %202 = vmatprep.subr.bf16.mxu0 0
    %203 = vmatpush1.bf16.msra.mxu0 %v180
    %204 = vmatprep.subr.bf16.mxu0 0
    %205 = vmatpush1.bf16.msra.mxu0 %v181
    %206 = vmatprep.subr.bf16.mxu0 0
    %207 = vmatpush1.bf16.msra.mxu0 0
    %208 = vmatprep.subr.bf16.mxu0 0
    %209 = vmatpush1.bf16.msra.mxu0 0
    %210 = vmatprep.subr.bf16.mxu0 0
    %211 = vmatpush1.bf16.msra.mxu0 0
    %212 = vmatprep.subr.bf16.mxu0 0
    %213 = vmatpush1.bf16.msra.mxu0 0
    %214 = vmatprep.subr.bf16.mxu0 0
    %215 = vmatpush1.bf16.msra.mxu0 0
    %216 = vmatprep.subr.bf16.mxu0 0
    %217 = vmatpush1.bf16.msra.mxu0 0
    %218 = vmatprep.subr.bf16.mxu0 0
    %219 = vmatpush1.bf16.msra.mxu0 0
    %220 = vmatprep.subr.bf16.mxu0 0
    %221 = vmatpush1.bf16.msra.mxu0 0
    %222 = vmatprep.mubr.bf16.mxu0 0
    %223 = vmatmul.mubr.bf16.gmra.mrb[0].mxu0 %v118
    %v224 = vpop.f32.mrb[0].mxu0
    %v225 = vadd.f32 %v140, %v224
    %v226 = vpop.f32.mrb[0].mxu0
    %v227 = vpop.f32.mrb[0].mxu0
    %v228 = vadd.f32 %v140, %v227
    %v229 = vpop.f32.mrb[0].mxu0
    %230 = vdwg.mxu0
    %v231 = vmax.f32 %v225, 0.0
    %v232 = vmax.f32 %v228, 0.0
    %v233 = vpack.c.bf16 %v232, %v231
    %v234 = vld [vmem:[#allocation7] sm:$0xf]
    %v235 = vld [vmem:[#allocation7 + $0x4] sm:$0xf]
    %v236 = vld [vmem:[#allocation7 + $0x8] sm:$0xf]
    %v237 = vld [vmem:[#allocation7 + $0xc] sm:$0xf]
    %v238 = vld [vmem:[#allocation7 + $0x10] sm:$0xf]
    %v239 = vld [vmem:[#allocation7 + $0x14] sm:$0xf]
    %v240 = vld [vmem:[#allocation7 + $0x18] sm:$0xf]
    %v241 = vld [vmem:[#allocation7 + $0x1c] sm:$0xf]
    %v242 = vld [vmem:[#allocation7 + $0x20] sm:$0xf]
    %v243 = vld [vmem:[#allocation7 + $0x24] sm:$0xf]
    %v244 = vld [vmem:[#allocation7 + $0x28] sm:$0xf]
    %v245 = vld [vmem:[#allocation7 + $0x2c] sm:$0xf]
    %v246 = vld [vmem:[#allocation7 + $0x30] sm:$0xf]
    %v247 = vld [vmem:[#allocation7 + $0x34] sm:$0xf]
    %v248 = vld [vmem:[#allocation7 + $0x38] sm:$0xf]
    %v249 = vld [vmem:[#allocation7 + $0x3c] sm:$0xf]
    %v250 = vld [vmem:[%s6] sm:$0x1]
    %v252 = vlaneseq
    %v253 = vshrl.u32 %v252, 7
    %v254 = vsub.s32 0, %v253
    %v255 = vrot.slane %v250, %v254
    %v273 = vunpack.c.l.b16 %v234
    %v274 = vunpack.c.l.b16 %v235
    %v275 = vunpack.c.l.b16 %v236
    %v276 = vunpack.c.l.b16 %v237
    %v277 = vunpack.c.l.b16 %v238
    %v278 = vunpack.c.l.b16 %v239
    %v279 = vunpack.c.l.b16 %v240
    %v280 = vunpack.c.l.b16 %v241
    %v281 = vunpack.c.l.b16 %v242
    %v282 = vunpack.c.l.b16 %v243
    %v283 = vunpack.c.l.b16 %v244
    %v284 = vunpack.c.l.b16 %v245
    %v285 = vunpack.c.l.b16 %v246
    %v286 = vunpack.c.l.b16 %v247
    %v287 = vunpack.c.l.b16 %v248
    %v288 = vunpack.c.l.b16 %v249
    %v289 = vpack.c.b16 %v274, %v273
    %v290 = vpack.c.b16 %v276, %v275
    %v291 = vpack.c.b16 %v278, %v277
    %v292 = vpack.c.b16 %v280, %v279
    %v293 = vpack.c.b16 %v282, %v281
    %v294 = vpack.c.b16 %v284, %v283
    %v295 = vpack.c.b16 %v286, %v285
    %v296 = vpack.c.b16 %v288, %v287
    %305 = vmatprep.subr.bf16.mxu0 0
    %306 = vmatpush1.bf16.msra.mxu0 %v289
    %307 = vmatprep.subr.bf16.mxu0 0
    %308 = vmatpush1.bf16.msra.mxu0 %v290
    %309 = vmatprep.subr.bf16.mxu0 0
    %310 = vmatpush1.bf16.msra.mxu0 %v291
    %311 = vmatprep.subr.bf16.mxu0 0
    %312 = vmatpush1.bf16.msra.mxu0 %v292
    %313 = vmatprep.subr.bf16.mxu0 0
    %314 = vmatpush1.bf16.msra.mxu0 %v293
    %315 = vmatprep.subr.bf16.mxu0 0
    %316 = vmatpush1.bf16.msra.mxu0 %v294
    %317 = vmatprep.subr.bf16.mxu0 0
    %318 = vmatpush1.bf16.msra.mxu0 %v295
    %319 = vmatprep.subr.bf16.mxu0 0
    %320 = vmatpush1.bf16.msra.mxu0 %v296
    %321 = vmatprep.subr.bf16.mxu0 0
    %322 = vmatpush1.bf16.msra.mxu0 0
    %323 = vmatprep.subr.bf16.mxu0 0
    %324 = vmatpush1.bf16.msra.mxu0 0
    %325 = vmatprep.subr.bf16.mxu0 0
    %326 = vmatpush1.bf16.msra.mxu0 0
    %327 = vmatprep.subr.bf16.mxu0 0
    %328 = vmatpush1.bf16.msra.mxu0 0
    %329 = vmatprep.subr.bf16.mxu0 0
    %330 = vmatpush1.bf16.msra.mxu0 0
    %331 = vmatprep.subr.bf16.mxu0 0
    %332 = vmatpush1.bf16.msra.mxu0 0
    %333 = vmatprep.subr.bf16.mxu0 0
    %334 = vmatpush1.bf16.msra.mxu0 0
    %335 = vmatprep.subr.bf16.mxu0 0
    %336 = vmatpush1.bf16.msra.mxu0 0
    %337 = vmatprep.mubr.bf16.mxu0 0
    %338 = vmatmul.mubr.bf16.gmra.mrb[0].mxu0 %v233
    %v339 = vpop.f32.mrb[0].mxu0
    %v340 = vadd.f32 %v255, %v339
    %v341 = vpop.f32.mrb[0].mxu0
    %v342 = vpop.f32.mrb[0].mxu0
    %v343 = vadd.f32 %v255, %v342
    %v344 = vpop.f32.mrb[0].mxu0
    %345 = vdwg.mxu0
    %346 = vst [vmem:[#allocation8] sm:$0xff] %v340
    %347 = vst [vmem:[#allocation8 + $0x8] sm:$0xff] %v343
    // Predicated region
    $region42: #{tpu_custom_call.1} parent=1 // pred_check
      _
    $region43: #{tpu_custom_call.1} parent=1 // pred_check_branch
      %349 = sbr.rel (0) target = $region45
    $region44: #{tpu_custom_call.1} parent=1 // pred_region
      %s351 = ssub.s32 256, 256
      %352 = vsyncadd [#allocation4], %s351
      %s353 = sshll.u32 [#allocation8], 4
      %s354 = int_to_ptr.vmem [resolvable:$true] %s353
      %359 = dma.vmem_to_hbm [thread:$0]  %s354, 256, %s7, [#allocation4], 128, 128, 8
    $region45: #{tpu_custom_call.1} parent=1 // pred_fallthru
      _
    // Predicated region
    $region46: #{tpu_custom_call.1} parent=1 // pred_check
      _
    $region47: #{tpu_custom_call.1} parent=1 // pred_check_branch
      %361 = sbr.rel (0) target = $region49
    $region48: #{tpu_custom_call.1} parent=1 // pred_region
      %362 = dma.done [#allocation4], 256
    $region49: #{tpu_custom_call.1} parent=1 // pred_fallthru
      _
    %363 = vsyncpa [#allocation3], 1
    %364 = vsyncpa [#allocation6], 1
    %365 = vsyncpa [#allocation4], 1

// kernel: tpu_custom_call.1
$region0: #{tpu_custom_call.1}
  #allocation0 [shape = 'u32[]', space=smem, size = 0x4, offset = 0x4, fixed_abs, tag = 'smem constant byte address 0x4 - core index']
  #allocation1 [shape = 'u32[144,128]{1,0:T(1,128)}', space=vmem, size = 0x12000, scoped, tag = 'internal scratch']
  %s0 = inlined_call_operand.hbm [shape: f32[16,128], index: 0, kind: input, shape index: {}]
  %s1 = inlined_call_operand.vmem [shape: f32[1,128], index: 1, kind: input, shape index: {}]
  %s2 = inlined_call_operand.vmem [shape: f32[1,128], index: 2, kind: input, shape index: {}]
  %s3 = inlined_call_operand.hbm [shape: bf16[128,128], index: 3, kind: input, shape index: {}]
  %s4 = inlined_call_operand.vmem [shape: f32[1,128], index: 4, kind: input, shape index: {}]
  %s5 = inlined_call_operand.hbm [shape: bf16[128,128], index: 5, kind: input, shape index: {}]
  %s6 = inlined_call_operand.vmem [shape: f32[1,128], index: 6, kind: input, shape index: {}]
  %s7 = inlined_call_operand.hbm [shape: f32[16,128], index: 7, kind: output, shape index: {}]
  %s8 = sld [smem:[#allocation0]]
  $region50: #{tpu_custom_call.1} parent=0
    _
  %s10 = ssub.s32 1, %s8
  %s11 = scalar_select 0, %s10, %s8
  $region1: #{tpu_custom_call.1} parent=0
    #allocation2 [shape = 'u8[8192]{0}', space=vmem, size = 0x2000, scoped, tag = 'input window, operand 0, single buffered']
    #allocation3 [shape = 's32[1]{0}', space=sflag, size = 0x4, scoped, tag = 'scoped memory for tpu_custom_call.1']
    #allocation4 [shape = 's32[1]{0}', space=sflag, size = 0x4, scoped, tag = 'scoped memory for tpu_custom_call.1']
    #allocation5 [shape = 'u8[32768]{0}', space=vmem, size = 0x8000, scoped, tag = 'input window, operand 3, single buffered']
    #allocation6 [shape = 's32[1]{0}', space=sflag, size = 0x4, scoped, tag = 'scoped memory for tpu_custom_call.1']
    #allocation7 [shape = 'u8[32768]{0}', space=vmem, size = 0x8000, scoped, tag = 'input window, operand 5, single buffered']
    #allocation8 [shape = 'u8[8192]{0}', space=vmem, size = 0x2000, scoped, tag = 'output window, operand 0, single buffered']
    %12 = vsyncpa [#allocation3], 0
    %13 = vsyncpa [#allocation6], 0
    %14 = vsyncpa [#allocation4], 0
    // Predicated region
    $region2: #{tpu_custom_call.1} parent=1 // pred_check
      _
    $region3: #{tpu_custom_call.1} parent=1 // pred_check_branch
      %16 = sbr.rel (0) target = $region5
    $region4: #{tpu_custom_call.1} parent=1 // pred_region
      %s18 = ssub.s32 256, 256
      %19 = vsyncadd [#allocation3], %s18
      %s20 = sshll.u32 [#allocation2], 4
      %s21 = int_to_ptr.vmem [resolvable:$true] %s20
      %26 = dma.hbm_to_vmem [thread:$0]  %s0, 256, %s21, [#allocation3], 128, 128, 8
    $region5: #{tpu_custom_call.1} parent=1 // pred_fallthru
      _
    // Predicated region
    $region6: #{tpu_custom_call.1} parent=1 // pred_check
      _
    $region7: #{tpu_custom_call.1} parent=1 // pred_check_branch
      %28 = sbr.rel (0) target = $region9
    $region8: #{tpu_custom_call.1} parent=1 // pred_region
      _
    $region9: #{tpu_custom_call.1} parent=1 // pred_fallthru
      _
    // Predicated region
    $region10: #{tpu_custom_call.1} parent=1 // pred_check
      _
    $region11: #{tpu_custom_call.1} parent=1 // pred_check_branch
      %30 = sbr.rel (0) target = $region13
    $region12: #{tpu_custom_call.1} parent=1 // pred_region
      _
    $region13: #{tpu_custom_call.1} parent=1 // pred_fallthru
      _
    // Predicated region
    $region14: #{tpu_custom_call.1} parent=1 // pred_check
      _
    $region15: #{tpu_custom_call.1} parent=1 // pred_check_branch
      %32 = sbr.rel (0) target = $region17
    $region16: #{tpu_custom_call.1} parent=1 // pred_region
      %s34 = ssub.s32 1024, 1024
      %35 = vsyncadd [#allocation6], %s34
      %s36 = sshll.u32 [#allocation5], 4
      %s37 = int_to_ptr.vmem [resolvable:$true] %s36
      %42 = dma.hbm_to_vmem [thread:$0]  %s3, 1024, %s37, [#allocation6], 64, 64, 4
    $region17: #{tpu_custom_call.1} parent=1 // pred_fallthru
      _
    // Predicated region
    $region18: #{tpu_custom_call.1} parent=1 // pred_check
      _
    $region19: #{tpu_custom_call.1} parent=1 // pred_check_branch
      %44 = sbr.rel (0) target = $region21
    $region20: #{tpu_custom_call.1} parent=1 // pred_region
      _
    $region21: #{tpu_custom_call.1} parent=1 // pred_fallthru
      _
    // Predicated region
    $region22: #{tpu_custom_call.1} parent=1 // pred_check
      _
    $region23: #{tpu_custom_call.1} parent=1 // pred_check_branch
      %46 = sbr.rel (0) target = $region25
    $region24: #{tpu_custom_call.1} parent=1 // pred_region
      %s48 = ssub.s32 1024, 1024
      %49 = vsyncadd [#allocation6], %s48
      %s50 = sshll.u32 [#allocation7], 4
      %s51 = int_to_ptr.vmem [resolvable:$true] %s50
      %56 = dma.hbm_to_vmem [thread:$0]  %s5, 1024, %s51, [#allocation6], 64, 64, 4
    $region25: #{tpu_custom_call.1} parent=1 // pred_fallthru
      _
    // Predicated region
    $region26: #{tpu_custom_call.1} parent=1 // pred_check
      _
    $region27: #{tpu_custom_call.1} parent=1 // pred_check_branch
      %58 = sbr.rel (0) target = $region29
    $region28: #{tpu_custom_call.1} parent=1 // pred_region
      _
    $region29: #{tpu_custom_call.1} parent=1 // pred_fallthru
      _
    // Predicated region
    $region30: #{tpu_custom_call.1} parent=1 // pred_check
      _
    $region31: #{tpu_custom_call.1} parent=1 // pred_check_branch
      %60 = sbr.rel (0) target = $region33
    $region32: #{tpu_custom_call.1} parent=1 // pred_region
      %61 = dma.done [#allocation3], 256
    $region33: #{tpu_custom_call.1} parent=1 // pred_fallthru
      _
    // Predicated region
    $region34: #{tpu_custom_call.1} parent=1 // pred_check
      _
    $region35: #{tpu_custom_call.1} parent=1 // pred_check_branch
      %63 = sbr.rel (0) target = $region37
    $region36: #{tpu_custom_call.1} parent=1 // pred_region
      %64 = dma.done [#allocation6], 1024
    $region37: #{tpu_custom_call.1} parent=1 // pred_fallthru
      _
    // Predicated region
    $region38: #{tpu_custom_call.1} parent=1 // pred_check
      _
    $region39: #{tpu_custom_call.1} parent=1 // pred_check_branch
      %66 = sbr.rel (0) target = $region41
    $region40: #{tpu_custom_call.1} parent=1 // pred_region
      %67 = dma.done [#allocation6], 1024
    $region41: #{tpu_custom_call.1} parent=1 // pred_fallthru
      _
    %v69 = vld [vmem:[#allocation2] sm:$0xff]
    %v70 = vld [vmem:[#allocation2 + $0x8] sm:$0xff]
    %v71 = vld [vmem:[%s1] sm:$0x1]
    %v72 = vld [vmem:[%s2] sm:$0x1]
    %73 = vadd.xlane.f32.xlu0 %v69
    %v74 = vpop.xlane.xlu0 %73
    %75 = vadd.xlane.f32.xlu0 %v70
    %v76 = vpop.xlane.xlu0 %75
    %v77 = vmul.f32 %v74, 0.03125
    %v78 = vmul.f32 %v76, 0.03125
    %v79 = vsub.f32 %v69, %v77
    %v80 = vsub.f32 %v70, %v78
    %v81 = vlaneseq
    %v82 = vand.u32 %v81, 127
    %vm83 = vcmp.lt.s32.totalorder %v82, 32
    %v84 = vsel %vm83, 1, 0
    %vm85 = vcmp.eq.s32.totalorder %v84, 1
    %v86 = vsel %vm85, %v79, 0.0
    %v87 = vsel %vm85, %v80, 0.0
    %v88 = vmul.f32 %v86, %v86
    %v89 = vmul.f32 %v87, %v87
    %90 = vadd.xlane.f32.xlu0 %v88
    %v91 = vpop.xlane.xlu0 %90
    %92 = vadd.xlane.f32.xlu0 %v89
    %v93 = vpop.xlane.xlu0 %92
    %v94 = vmul.f32 %v91, 0.03125
    %v95 = vmul.f32 %v93, 0.03125
    %v96 = vadd.f32 %v94, 1e-06
    %v97 = vadd.f32 %v95, 1e-06
    %v98 = vrsqrt.pop %v96
    %v99 = vrsqrt.pop %v97
    %v100 = vmul.f32 %v86, %v98
    %v101 = vmul.f32 %v87, %v99
    %v103 = vlaneseq
    %v104 = vshrl.u32 %v103, 7
    %v105 = vsub.s32 0, %v104
    %v106 = vrot.slane %v71, %v105
    %v108 = vmul.f32 %v100, %v106
    %v109 = vmul.f32 %v101, %v106
    %v111 = vlaneseq
    %v112 = vshrl.u32 %v111, 7
    %v113 = vsub.s32 0, %v112
    %v114 = vrot.slane %v72, %v113
    %v116 = vadd.f32 %v108, %v114
    %v117 = vadd.f32 %v109, %v114
    %v118 = vpack.c.bf16 %v117, %v116
    %v119 = vld [vmem:[#allocation5] sm:$0xf]
    %v120 = vld [vmem:[#allocation5 + $0x4] sm:$0xf]
    %v121 = vld [vmem:[#allocation5 + $0x8] sm:$0xf]
    %v122 = vld [vmem:[#allocation5 + $0xc] sm:$0xf]
    %v123 = vld [vmem:[#allocation5 + $0x10] sm:$0xf]
    %v124 = vld [vmem:[#allocation5 + $0x14] sm:$0xf]
    %v125 = vld [vmem:[#allocation5 + $0x18] sm:$0xf]
    %v126 = vld [vmem:[#allocation5 + $0x1c] sm:$0xf]
    %v127 = vld [vmem:[#allocation5 + $0x20] sm:$0xf]
    %v128 = vld [vmem:[#allocation5 + $0x24] sm:$0xf]
    %v129 = vld [vmem:[#allocation5 + $0x28] sm:$0xf]
    %v130 = vld [vmem:[#allocation5 + $0x2c] sm:$0xf]
    %v131 = vld [vmem:[#allocation5 + $0x30] sm:$0xf]
    %v132 = vld [vmem:[#allocation5 + $0x34] sm:$0xf]
    %v133 = vld [vmem:[#allocation5 + $0x38] sm:$0xf]
    %v134 = vld [vmem:[#allocation5 + $0x3c] sm:$0xf]
    %v135 = vld [vmem:[%s4] sm:$0x1]
    %v137 = vlaneseq
    %v138 = vshrl.u32 %v137, 7
    %v139 = vsub.s32 0, %v138
    %v140 = vrot.slane %v135, %v139
    %v158 = vunpack.c.l.b16 %v119
    %v159 = vunpack.c.l.b16 %v120
    %v160 = vunpack.c.l.b16 %v121
    %v161 = vunpack.c.l.b16 %v122
    %v162 = vunpack.c.l.b16 %v123
    %v163 = vunpack.c.l.b16 %v124
    %v164 = vunpack.c.l.b16 %v125
    %v165 = vunpack.c.l.b16 %v126
    %v166 = vunpack.c.l.b16 %v127
    %v167 = vunpack.c.l.b16 %v128
    %v168 = vunpack.c.l.b16 %v129
    %v169 = vunpack.c.l.b16 %v130
    %v170 = vunpack.c.l.b16 %v131
    %v171 = vunpack.c.l.b16 %v132
    %v172 = vunpack.c.l.b16 %v133
    %v173 = vunpack.c.l.b16 %v134
    %v174 = vpack.c.b16 %v159, %v158
    %v175 = vpack.c.b16 %v161, %v160
    %v176 = vpack.c.b16 %v163, %v162
    %v177 = vpack.c.b16 %v165, %v164
    %v178 = vpack.c.b16 %v167, %v166
    %v179 = vpack.c.b16 %v169, %v168
    %v180 = vpack.c.b16 %v171, %v170
    %v181 = vpack.c.b16 %v173, %v172
    %190 = vmatprep.subr.bf16.mxu0 0
    %191 = vmatpush1.bf16.msra.mxu0 %v174
    %192 = vmatprep.subr.bf16.mxu0 0
    %193 = vmatpush1.bf16.msra.mxu0 %v175
    %194 = vmatprep.subr.bf16.mxu0 0
    %195 = vmatpush1.bf16.msra.mxu0 %v176
    %196 = vmatprep.subr.bf16.mxu0 0
    %197 = vmatpush1.bf16.msra.mxu0 %v177
    %198 = vmatprep.subr.bf16.mxu0 0
    %199 = vmatpush1.bf16.msra.mxu0 %v178
    %200 = vmatprep.subr.bf16.mxu0 0
    %201 = vmatpush1.bf16.msra.mxu0 %v179
    %202 = vmatprep.subr.bf16.mxu0 0
    %203 = vmatpush1.bf16.msra.mxu0 %v180
    %204 = vmatprep.subr.bf16.mxu0 0
    %205 = vmatpush1.bf16.msra.mxu0 %v181
    %206 = vmatprep.subr.bf16.mxu0 0
    %207 = vmatpush1.bf16.msra.mxu0 0
    %208 = vmatprep.subr.bf16.mxu0 0
    %209 = vmatpush1.bf16.msra.mxu0 0
    %210 = vmatprep.subr.bf16.mxu0 0
    %211 = vmatpush1.bf16.msra.mxu0 0
    %212 = vmatprep.subr.bf16.mxu0 0
    %213 = vmatpush1.bf16.msra.mxu0 0
    %214 = vmatprep.subr.bf16.mxu0 0
    %215 = vmatpush1.bf16.msra.mxu0 0
    %216 = vmatprep.subr.bf16.mxu0 0
    %217 = vmatpush1.bf16.msra.mxu0 0
    %218 = vmatprep.subr.bf16.mxu0 0
    %219 = vmatpush1.bf16.msra.mxu0 0
    %220 = vmatprep.subr.bf16.mxu0 0
    %221 = vmatpush1.bf16.msra.mxu0 0
    %222 = vmatprep.mubr.bf16.mxu0 0
    %223 = vmatmul.mubr.bf16.gmra.mrb[0].mxu0 %v118
    %v224 = vpop.f32.mrb[0].mxu0
    %v225 = vadd.f32 %v140, %v224
    %v226 = vpop.f32.mrb[0].mxu0
    %v227 = vpop.f32.mrb[0].mxu0
    %v228 = vadd.f32 %v140, %v227
    %v229 = vpop.f32.mrb[0].mxu0
    %230 = vdwg.mxu0
    %v231 = vmax.f32 %v225, 0.0
    %v232 = vmax.f32 %v228, 0.0
    %v233 = vpack.c.bf16 %v232, %v231
    %v234 = vld [vmem:[#allocation7] sm:$0xf]
    %v235 = vld [vmem:[#allocation7 + $0x4] sm:$0xf]
    %v236 = vld [vmem:[#allocation7 + $0x8] sm:$0xf]
    %v237 = vld [vmem:[#allocation7 + $0xc] sm:$0xf]
    %v238 = vld [vmem:[#allocation7 + $0x10] sm:$0xf]
    %v239 = vld [vmem:[#allocation7 + $0x14] sm:$0xf]
    %v240 = vld [vmem:[#allocation7 + $0x18] sm:$0xf]
    %v241 = vld [vmem:[#allocation7 + $0x1c] sm:$0xf]
    %v242 = vld [vmem:[#allocation7 + $0x20] sm:$0xf]
    %v243 = vld [vmem:[#allocation7 + $0x24] sm:$0xf]
    %v244 = vld [vmem:[#allocation7 + $0x28] sm:$0xf]
    %v245 = vld [vmem:[#allocation7 + $0x2c] sm:$0xf]
    %v246 = vld [vmem:[#allocation7 + $0x30] sm:$0xf]
    %v247 = vld [vmem:[#allocation7 + $0x34] sm:$0xf]
    %v248 = vld [vmem:[#allocation7 + $0x38] sm:$0xf]
    %v249 = vld [vmem:[#allocation7 + $0x3c] sm:$0xf]
    %v250 = vld [vmem:[%s6] sm:$0x1]
    %v252 = vlaneseq
    %v253 = vshrl.u32 %v252, 7
    %v254 = vsub.s32 0, %v253
    %v255 = vrot.slane %v250, %v254
    %v273 = vunpack.c.l.b16 %v234
    %v274 = vunpack.c.l.b16 %v235
    %v275 = vunpack.c.l.b16 %v236
    %v276 = vunpack.c.l.b16 %v237
    %v277 = vunpack.c.l.b16 %v238
    %v278 = vunpack.c.l.b16 %v239
    %v279 = vunpack.c.l.b16 %v240
    %v280 = vunpack.c.l.b16 %v241
    %v281 = vunpack.c.l.b16 %v242
    %v282 = vunpack.c.l.b16 %v243
    %v283 = vunpack.c.l.b16 %v244
    %v284 = vunpack.c.l.b16 %v245
    %v285 = vunpack.c.l.b16 %v246
    %v286 = vunpack.c.l.b16 %v247
    %v287 = vunpack.c.l.b16 %v248
    %v288 = vunpack.c.l.b16 %v249
    %v289 = vpack.c.b16 %v274, %v273
    %v290 = vpack.c.b16 %v276, %v275
    %v291 = vpack.c.b16 %v278, %v277
    %v292 = vpack.c.b16 %v280, %v279
    %v293 = vpack.c.b16 %v282, %v281
    %v294 = vpack.c.b16 %v284, %v283
    %v295 = vpack.c.b16 %v286, %v285
    %v296 = vpack.c.b16 %v288, %v287
    %305 = vmatprep.subr.bf16.mxu0 0
    %306 = vmatpush1.bf16.msra.mxu0 %v289
    %307 = vmatprep.subr.bf16.mxu0 0
    %308 = vmatpush1.bf16.msra.mxu0 %v290
    %309 = vmatprep.subr.bf16.mxu0 0
    %310 = vmatpush1.bf16.msra.mxu0 %v291
    %311 = vmatprep.subr.bf16.mxu0 0
    %312 = vmatpush1.bf16.msra.mxu0 %v292
    %313 = vmatprep.subr.bf16.mxu0 0
    %314 = vmatpush1.bf16.msra.mxu0 %v293
    %315 = vmatprep.subr.bf16.mxu0 0
    %316 = vmatpush1.bf16.msra.mxu0 %v294
    %317 = vmatprep.subr.bf16.mxu0 0
    %318 = vmatpush1.bf16.msra.mxu0 %v295
    %319 = vmatprep.subr.bf16.mxu0 0
    %320 = vmatpush1.bf16.msra.mxu0 %v296
    %321 = vmatprep.subr.bf16.mxu0 0
    %322 = vmatpush1.bf16.msra.mxu0 0
    %323 = vmatprep.subr.bf16.mxu0 0
    %324 = vmatpush1.bf16.msra.mxu0 0
    %325 = vmatprep.subr.bf16.mxu0 0
    %326 = vmatpush1.bf16.msra.mxu0 0
    %327 = vmatprep.subr.bf16.mxu0 0
    %328 = vmatpush1.bf16.msra.mxu0 0
    %329 = vmatprep.subr.bf16.mxu0 0
    %330 = vmatpush1.bf16.msra.mxu0 0
    %331 = vmatprep.subr.bf16.mxu0 0
    %332 = vmatpush1.bf16.msra.mxu0 0
    %333 = vmatprep.subr.bf16.mxu0 0
    %334 = vmatpush1.bf16.msra.mxu0 0
    %335 = vmatprep.subr.bf16.mxu0 0
    %336 = vmatpush1.bf16.msra.mxu0 0
    %337 = vmatprep.mubr.bf16.mxu0 0
    %338 = vmatmul.mubr.bf16.gmra.mrb[0].mxu0 %v233
    %v339 = vpop.f32.mrb[0].mxu0
    %v340 = vadd.f32 %v255, %v339
    %v341 = vpop.f32.mrb[0].mxu0
    %v342 = vpop.f32.mrb[0].mxu0
    %v343 = vadd.f32 %v255, %v342
    %v344 = vpop.f32.mrb[0].mxu0
    %345 = vdwg.mxu0
    %346 = vst [vmem:[#allocation8] sm:$0xff] %v340
    %347 = vst [vmem:[#allocation8 + $0x8] sm:$0xff] %v343
    // Predicated region
    $region42: #{tpu_custom_call.1} parent=1 // pred_check
      _
    $region43: #{tpu_custom_call.1} parent=1 // pred_check_branch
      %349 = sbr.rel (0) target = $region45
    $region44: #{tpu_custom_call.1} parent=1 // pred_region
      %s351 = ssub.s32 256, 256
      %352 = vsyncadd [#allocation4], %s351
      %s353 = sshll.u32 [#allocation8], 4
      %s354 = int_to_ptr.vmem [resolvable:$true] %s353
      %359 = dma.vmem_to_hbm [thread:$0]  %s354, 256, %s7, [#allocation4], 128, 128, 8
    $region45: #{tpu_custom_call.1} parent=1 // pred_fallthru
      _
    // Predicated region
    $region46: #{tpu_custom_call.1} parent=1 // pred_check
      _
    $region47: #{tpu_custom_call.1} parent=1 // pred_check_branch
      %361 = sbr.rel (0) target = $region49
    $region48: #{tpu_custom_call.1} parent=1 // pred_region
      %362 = dma.done [#allocation4], 256
    $region49: #{tpu_custom_call.1} parent=1 // pred_fallthru
      _
    %363 = vsyncpa [#allocation3], 1
    %364 = vsyncpa [#allocation6], 1
    %365 = vsyncpa [#allocation4], 1

</llo_original>
